<compile_context>
chip_gen: v7x
topology: tpu7x:2x2x1
jax: 0.10.0
libtpu: 0.0.40
codegen_flags: <defaults>
</compile_context>

<pallas_src>
from functools import partial

import jax
import jax.numpy as jnp
from jax.experimental import pallas as pl
from jax.experimental.pallas import tpu as pltpu


def _round_up(x, m):
    return ((x + m - 1) // m) * m


# ---------------------------------------------------------------------------
# Kernel
# ---------------------------------------------------------------------------
def _mlp_block_kernel(x_ref, w_ref, b_ref, o_ref, act_ref, *, resident):
    """One grid step = (batch tile i, layer l); layer axis is innermost.

    resident=True  -> w_ref holds the whole (L, F, F) stack in VMEM, index by l.
    resident=False -> w_ref is the per-layer (1, F, F) block streamed along l.
    """
    l = pl.program_id(1)
    last = pl.num_programs(1) - 1
    wi = l if resident else 0

    def step(src):
        # MXU: bf16 x bf16 -> f32 accumulate; bias + ReLU epilogue in f32.
        y = jnp.dot(src, w_ref[wi], preferred_element_type=jnp.float32)
        y = jnp.maximum(y + b_ref[wi], 0.0)
        # Dropout is identity in eval mode.
        # TODO(synk): training-mode dropout (pltpu.prng_seed / prng_random_bits,
        # scaled by 1/(1-p)) not implemented.

        @pl.when(l < last)        # keep activation resident for the next layer
        def _():
            act_ref[...] = y.astype(act_ref.dtype)

        @pl.when(l == last)       # final layer: single HBM writeback per tile
        def _():
            o_ref[...] = y.astype(o_ref.dtype)

    # Layer 0 reads its operand straight from the input tile (no seed copy).
    @pl.when(l == 0)
    def _():
        step(x_ref[...])

    @pl.when(l != 0)
    def _():
        step(act_ref[...])


# ---------------------------------------------------------------------------
# One-time parameter packing (hoisted out of the forward)
# ---------------------------------------------------------------------------
def pack_mlp_params(params, *, compute_dtype=jnp.bfloat16):
    """Pad to lane-dense feature dim and cast to the MXU compute dtype ONCE."""
    L = len(params)
    F = params[0][0].shape[0]
    F_pad = _round_up(F, 128)
    w_stack = jnp.stack([w for (w, _) in params]).astype(compute_dtype)  # (L,F,F) in->out
    b_stack = jnp.stack([b for (_, b) in params]).astype(jnp.float32)    # (L,F)
    w_p = jnp.zeros((L, F_pad, F_pad), compute_dtype).at[:, :F, :F].set(w_stack)
    b_p = jnp.zeros((L, 1, F_pad), jnp.float32).at[:, 0, :F].set(b_stack)
    return dict(w=w_p, b=b_p, L=L, F=F, F_pad=F_pad, compute_dtype=compute_dtype)


# ---------------------------------------------------------------------------
# Tile planning with an explicit VMEM budget
# ---------------------------------------------------------------------------
def _plan_tiles(M, F_pad, L, out_itemsize, *, tm_max, vmem_budget):
    m16 = _round_up(M, 16)          # bf16 sublane packing

    def need(tm, resident):
        x_b = 2 * tm * F_pad * 2                                   # bf16 in, 2-buf
        o_b = 2 * tm * F_pad * out_itemsize                        # out, 2-buf
        a_b = tm * F_pad * 2                                       # act scratch
        w_b = (2 * L if resident else 2) * F_pad * F_pad * 2       # conservative
        b_b = 2 * L * F_pad * 4                                    # bias
        return x_b + o_b + a_b + w_b + b_b

    if m16 <= 128:
        tm = m16
    else:
        tm = 128
        for cand in (256, 384, 512, 768, 1024):                    # big tiles first-class
            if cand > tm_max:
                break
            if need(cand, False) <= vmem_budget:
                tm = cand
        # v7x megacore: keep >= 2 batch tiles so the "parallel" grid axis can
        # split across both TensorCores (no effect on single-TC v5e/v6e).
        if tm >= m16:
            tm = max(128, _round_up((m16 + 1) // 2, 128))
    M_pad = _round_up(M, tm)

    resident = need(tm, True) <= vmem_budget
    vmem_limit = min(max(int(need(tm, resident) * 1.3) + (4 << 20), 32 << 20),
                     100 << 20)
    return tm, M_pad, resident, vmem_limit


# ---------------------------------------------------------------------------
# Forward
# ---------------------------------------------------------------------------
def mlp_block_forward(x, packed, *, tm_max=512, out_dtype=None,
                      vmem_budget=40 << 20):
    """Fused MLPBlock forward (eval-mode dropout == identity)."""
    M, F = x.shape
    assert F == packed["F"], "feature size mismatch with packed params"
    L, F_pad = packed["L"], packed["F_pad"]
    compute_dtype = packed["compute_dtype"]
    # Pass out_dtype=jnp.bfloat16 to halve output HBM writeback if acceptable.
    out_dtype = x.dtype if out_dtype is None else out_dtype
    out_itemsize = jnp.dtype(out_dtype).itemsize

    tm, M_pad, resident, vmem_limit = _plan_tiles(
        M, F_pad, L, out_itemsize, tm_max=tm_max, vmem_budget=vmem_budget)

    # Per-call work is only input padding/casting (O(M*F), cheap vs weights).
    x_p = jnp.zeros((M_pad, F_pad), compute_dtype).at[:M, :F].set(
        x.astype(compute_dtype))

    if resident:
        # Whole weight stack stays in VMEM; no per-batch-tile re-streaming.
        w_spec = pl.BlockSpec((L, F_pad, F_pad), lambda i, l: (0, 0, 0))
        b_spec = pl.BlockSpec((L, 1, F_pad), lambda i, l: (0, 0, 0))
    else:
        # Per-layer weight block, double-buffered (prefetched) along l.
        # TODO(synk): add a K/N weight-tiling grid axis (MXU-sized tk/tn) once a
        # single (F_pad, F_pad) block no longer fits the VMEM budget.
        w_spec = pl.BlockSpec((1, F_pad, F_pad), lambda i, l: (l, 0, 0))
        b_spec = pl.BlockSpec((1, 1, F_pad), lambda i, l: (l, 0, 0))

    out = pl.pallas_call(
        partial(_mlp_block_kernel, resident=resident),
        out_shape=jax.ShapeDtypeStruct((M_pad, F_pad), out_dtype),
        grid_spec=pltpu.PrefetchScalarGridSpec(
            num_scalar_prefetch=0,
            grid=(M_pad // tm, L),
            in_specs=[
                pl.BlockSpec((tm, F_pad), lambda i, l: (i, 0)),   # x tile
                w_spec,
                b_spec,
            ],
            out_specs=pl.BlockSpec((tm, F_pad), lambda i, l: (i, 0)),
            scratch_shapes=[pltpu.VMEM((tm, F_pad), compute_dtype)],
        ),
        compiler_params=pltpu.CompilerParams(
            dimension_semantics=("parallel", "arbitrary"),
            vmem_limit_bytes=vmem_limit),
    )(x_p, packed["w"], packed["b"])

    return out[:M, :F]


# ---------------------------------------------------------------------------
# Init + reference
# ---------------------------------------------------------------------------
def init_mlp_block_params(key, layers, layer_size, dtype=jnp.float32):
    """Deterministic init mirroring nn.Linear; weights stored transposed (in, out)."""
    params = []
    bound = 1.0 / jnp.sqrt(layer_size)
    for _ in range(layers):
        key, kw, kb = jax.random.split(key, 3)
        w = jax.random.uniform(kw, (layer_size, layer_size), dtype,
                               minval=-bound, maxval=bound)   # (out, in)
        b = jax.random.uniform(kb, (layer_size,), dtype,
                               minval=-bound, maxval=bound)
        params.append((w.T, b))   # store (in, out)
    return params


def mlp_block_reference(x, params, compute_dtype=None):
    """Pure-JAX reference.  If compute_dtype is set, mimic the kernel's casts."""
    a = x
    y = x
    for w_t, b in params:
        if compute_dtype is not None:
            a = a.astype(compute_dtype)
            w_t = w_t.astype(compute_dtype)
        y = jnp.dot(a, w_t, preferred_element_type=jnp.float32)
        y = jnp.maximum(y + b.astype(jnp.float32), 0.0)
        a = y
    return y.astype(jnp.float32)


if __name__ == "__main__":
    LAYERS = 2
    LAYER_SIZE = 128
    BATCH = 16

    key = jax.random.PRNGKey(0)
    key, kx = jax.random.split(key)
    x = jax.random.normal(kx, (BATCH, LAYER_SIZE), jnp.float32)
    params = init_mlp_block_params(key, LAYERS, LAYER_SIZE)
    packed = pack_mlp_params(params)          # one-time weight packing

    out = jax.block_until_ready(mlp_block_forward(x, packed))
    assert out.shape == (BATCH, LAYER_SIZE)

    # Tight check vs a reference that mimics the kernel's bf16/f32 arithmetic.
    ref_bf16 = mlp_block_reference(x, params, compute_dtype=jnp.bfloat16)
    assert jnp.allclose(out, ref_bf16, atol=1e-2, rtol=1e-2), "mismatch (bf16 ref)"
    # Loose check vs the pure-f32 module semantics (bf16 drift grows with depth).
    ref_f32 = mlp_block_reference(x, params)
    assert jnp.allclose(out, ref_f32, atol=5e-2, rtol=5e-2), "mismatch (f32 ref)"

    # Non-aligned shapes exercise the batch / feature padding path.
    x2 = jax.random.normal(jax.random.PRNGKey(1), (10, 96), jnp.float32)
    params2 = init_mlp_block_params(jax.random.PRNGKey(2), 3, 96)
    packed2 = pack_mlp_params(params2)
    out2 = jax.block_until_ready(mlp_block_forward(x2, packed2))
    ref2 = mlp_block_reference(x2, params2, compute_dtype=jnp.bfloat16)
    assert out2.shape == (10, 96)
    assert jnp.allclose(out2, ref2, atol=1e-2, rtol=1e-2), "mismatch (padded case)"

    print("KERNEL_OK")
</pallas_src>

<mosaic_0001>
module attributes {stable_mosaic.version = 11 : i64} {
  func.func @_mlp_block_kernel(%arg0: i32, %arg1: i32, %arg2: memref<16x128xbf16, #tpu.memory_space<vmem>>, %arg3: memref<2x128x128xbf16, #tpu.memory_space<vmem>>, %arg4: memref<2x1x128xf32, #tpu.memory_space<vmem>>, %arg5: memref<16x128xf32, #tpu.memory_space<vmem>>, %arg6: memref<16x128xbf16, #tpu.memory_space<vmem>>) attributes {dimension_semantics = [#tpu.dimension_semantics<parallel>, #tpu.dimension_semantics<arbitrary>], iteration_bounds = array<i64: 1, 2>, scalar_prefetch = 0 : i64, scratch_operands = 1 : i64, tpu.core_type = #tpu.core_type<tc>, window_params = [{transform_indices = @transform_0, window_bounds = array<i64: 16, 128>}, {pipeline_mode = #tpu.pipeline_mode<synchronous>, transform_indices = @transform_1, window_bounds = array<i64: 2, 128, 128>}, {pipeline_mode = #tpu.pipeline_mode<synchronous>, transform_indices = @transform_2, window_bounds = array<i64: 2, 1, 128>}, {transform_indices = @transform_3, window_bounds = array<i64: 16, 128>}]} {
    %c0_i32 = arith.constant 0 : i32
    %0 = arith.cmpi eq, %arg1, %c0_i32 : i32
    %1 = arith.extui %0 : i1 to i32
    %c0_i32_0 = arith.constant 0 : i32
    %2 = arith.cmpi ne, %1, %c0_i32_0 : i32
    scf.if %2 {
      %c0 = arith.constant 0 : index
      %c0_3 = arith.constant 0 : index
      %6 = vector.load %arg2[%c0, %c0_3] : memref<16x128xbf16, #tpu.memory_space<vmem>>, vector<16x128xbf16>
      %7 = arith.index_cast %arg1 : i32 to index
      %c0_4 = arith.constant 0 : index
      %c0_5 = arith.constant 0 : index
      %8 = vector.load %arg3[%7, %c0_4, %c0_5] : memref<2x128x128xbf16, #tpu.memory_space<vmem>>, vector<1x128x128xbf16>
      %9 = vector.shape_cast %8 : vector<1x128x128xbf16> to vector<128x128xbf16>
      %cst = arith.constant dense<0.000000e+00> : vector<16x128xf32>
      %10 = tpu.matmul %6, %9, %cst {dimension_numbers = #tpu.dot_dimension_numbers<[1], [0], [0], [1], [0, 0, 1, 1], [], []>} : vector<16x128xbf16>, vector<128x128xbf16>, vector<16x128xf32> -> vector<16x128xf32>
      %11 = arith.index_cast %arg1 : i32 to index
      %c0_6 = arith.constant 0 : index
      %c0_7 = arith.constant 0 : index
      %12 = vector.load %arg4[%11, %c0_6, %c0_7] : memref<2x1x128xf32, #tpu.memory_space<vmem>>, vector<1x1x128xf32>
      %13 = vector.shape_cast %12 : vector<1x1x128xf32> to vector<1x128xf32>
      %14 = vector.broadcast %13 : vector<1x128xf32> to vector<16x128xf32>
      %15 = arith.addf %10, %14 : vector<16x128xf32>
      %cst_8 = arith.constant 0.000000e+00 : f32
      %16 = vector.broadcast %cst_8 : f32 to vector<16x128xf32>
      %17 = arith.maximumf %15, %16 : vector<16x128xf32>
      %c1_i32 = arith.constant 1 : i32
      %18 = arith.cmpi slt, %arg1, %c1_i32 : i32
      %19 = arith.extui %18 : i1 to i32
      %c0_i32_9 = arith.constant 0 : i32
      %20 = arith.cmpi ne, %19, %c0_i32_9 : i32
      scf.if %20 {
        %24 = arith.truncf %17 : vector<16x128xf32> to vector<16x128xbf16>
        %c0_12 = arith.constant 0 : index
        %c0_13 = arith.constant 0 : index
        %25 = vector.load %arg6[%c0_12, %c0_13] : memref<16x128xbf16, #tpu.memory_space<vmem>>, vector<16x128xbf16>
        tpu.vector_store %arg6[%c0_12, %c0_13], %24 {strides = array<i32>} : memref<16x128xbf16, #tpu.memory_space<vmem>>, vector<16x128xbf16>,
      } else {
      }
      %c1_i32_10 = arith.constant 1 : i32
      %21 = arith.cmpi eq, %arg1, %c1_i32_10 : i32
      %22 = arith.extui %21 : i1 to i32
      %c0_i32_11 = arith.constant 0 : i32
      %23 = arith.cmpi ne, %22, %c0_i32_11 : i32
      scf.if %23 {
        %c0_12 = arith.constant 0 : index
        %c0_13 = arith.constant 0 : index
        %24 = vector.load %arg5[%c0_12, %c0_13] : memref<16x128xf32, #tpu.memory_space<vmem>>, vector<16x128xf32>
        tpu.vector_store %arg5[%c0_12, %c0_13], %17 {strides = array<i32>} : memref<16x128xf32, #tpu.memory_space<vmem>>, vector<16x128xf32>,
      } else {
      }
    } else {
    }
    %c0_i32_1 = arith.constant 0 : i32
    %3 = arith.cmpi ne, %arg1, %c0_i32_1 : i32
    %4 = arith.extui %3 : i1 to i32
    %c0_i32_2 = arith.constant 0 : i32
    %5 = arith.cmpi ne, %4, %c0_i32_2 : i32
    scf.if %5 {
      %c0 = arith.constant 0 : index
      %c0_3 = arith.constant 0 : index
      %6 = vector.load %arg6[%c0, %c0_3] : memref<16x128xbf16, #tpu.memory_space<vmem>>, vector<16x128xbf16>
      %7 = arith.index_cast %arg1 : i32 to index
      %c0_4 = arith.constant 0 : index
      %c0_5 = arith.constant 0 : index
      %8 = vector.load %arg3[%7, %c0_4, %c0_5] : memref<2x128x128xbf16, #tpu.memory_space<vmem>>, vector<1x128x128xbf16>
      %9 = vector.shape_cast %8 : vector<1x128x128xbf16> to vector<128x128xbf16>
      %cst = arith.constant dense<0.000000e+00> : vector<16x128xf32>
      %10 = tpu.matmul %6, %9, %cst {dimension_numbers = #tpu.dot_dimension_numbers<[1], [0], [0], [1], [0, 0, 1, 1], [], []>} : vector<16x128xbf16>, vector<128x128xbf16>, vector<16x128xf32> -> vector<16x128xf32>
      %11 = arith.index_cast %arg1 : i32 to index
      %c0_6 = arith.constant 0 : index
      %c0_7 = arith.constant 0 : index
      %12 = vector.load %arg4[%11, %c0_6, %c0_7] : memref<2x1x128xf32, #tpu.memory_space<vmem>>, vector<1x1x128xf32>
      %13 = vector.shape_cast %12 : vector<1x1x128xf32> to vector<1x128xf32>
      %14 = vector.broadcast %13 : vector<1x128xf32> to vector<16x128xf32>
      %15 = arith.addf %10, %14 : vector<16x128xf32>
      %cst_8 = arith.constant 0.000000e+00 : f32
      %16 = vector.broadcast %cst_8 : f32 to vector<16x128xf32>
      %17 = arith.maximumf %15, %16 : vector<16x128xf32>
      %c1_i32 = arith.constant 1 : i32
      %18 = arith.cmpi slt, %arg1, %c1_i32 : i32
      %19 = arith.extui %18 : i1 to i32
      %c0_i32_9 = arith.constant 0 : i32
      %20 = arith.cmpi ne, %19, %c0_i32_9 : i32
      scf.if %20 {
        %24 = arith.truncf %17 : vector<16x128xf32> to vector<16x128xbf16>
        %c0_12 = arith.constant 0 : index
        %c0_13 = arith.constant 0 : index
        %25 = vector.load %arg6[%c0_12, %c0_13] : memref<16x128xbf16, #tpu.memory_space<vmem>>, vector<16x128xbf16>
        tpu.vector_store %arg6[%c0_12, %c0_13], %24 {strides = array<i32>} : memref<16x128xbf16, #tpu.memory_space<vmem>>, vector<16x128xbf16>,
      } else {
      }
      %c1_i32_10 = arith.constant 1 : i32
      %21 = arith.cmpi eq, %arg1, %c1_i32_10 : i32
      %22 = arith.extui %21 : i1 to i32
      %c0_i32_11 = arith.constant 0 : i32
      %23 = arith.cmpi ne, %22, %c0_i32_11 : i32
      scf.if %23 {
        %c0_12 = arith.constant 0 : index
        %c0_13 = arith.constant 0 : index
        %24 = vector.load %arg5[%c0_12, %c0_13] : memref<16x128xf32, #tpu.memory_space<vmem>>, vector<16x128xf32>
        tpu.vector_store %arg5[%c0_12, %c0_13], %17 {strides = array<i32>} : memref<16x128xf32, #tpu.memory_space<vmem>>, vector<16x128xf32>,
      } else {
      }
    } else {
    }
    return
  }
  func.func @transform_0(%arg0: i32, %arg1: i32) -> (i32, i32) {
    %c0_i32 = arith.constant 0 : i32
    %c0_i32_0 = arith.constant 0 : i32
    return %arg0, %c0_i32 : i32, i32
  }
  func.func @transform_1(%arg0: i32, %arg1: i32) -> (i32, i32, i32) {
    %c0_i32 = arith.constant 0 : i32
    %c0_i32_0 = arith.constant 0 : i32
    %c0_i32_1 = arith.constant 0 : i32
    %c0_i32_2 = arith.constant 0 : i32
    return %c0_i32, %c0_i32_0, %c0_i32_1 : i32, i32, i32
  }
  func.func @transform_2(%arg0: i32, %arg1: i32) -> (i32, i32, i32) {
    %c0_i32 = arith.constant 0 : i32
    %c0_i32_0 = arith.constant 0 : i32
    %c0_i32_1 = arith.constant 0 : i32
    %c0_i32_2 = arith.constant 0 : i32
    return %c0_i32, %c0_i32_0, %c0_i32_1 : i32, i32, i32
  }
  func.func @transform_3(%arg0: i32, %arg1: i32) -> (i32, i32) {
    %c0_i32 = arith.constant 0 : i32
    %c0_i32_0 = arith.constant 0 : i32
    return %arg0, %c0_i32 : i32, i32
  }
}

</mosaic_0001>

<llo_original>
// kernel: tpu_custom_call.1
$region0: #{tpu_custom_call.1}
  #allocation0 [shape = 'u32[]', space=smem, size = 0x4, offset = 0x4, fixed_abs, tag = 'smem constant byte address 0x4 - core index']
  #allocation1 [shape = 'u32[144,128]{1,0:T(1,128)}', space=vmem, size = 0x12000, scoped, tag = 'internal scratch']
  #allocation2 [shape = 'bf16[16,128]{1,0:T(16,128)(2,1)}', space=vmem, size = 0x1000, scoped, tag = 'scratch operand']
  %s0 = inlined_call_operand.hbm [shape: bf16[16,128], index: 0, kind: input, shape index: {}]
  %s1 = inlined_call_operand.hbm [shape: bf16[2,128,128], index: 1, kind: input, shape index: {}]
  %s2 = inlined_call_operand.vmem [shape: f32[2,1,128], index: 2, kind: input, shape index: {}]
  %s3 = inlined_call_operand.hbm [shape: f32[16,128], index: 3, kind: output, shape index: {}]
  %s4 = sld [smem:[#allocation0]]
  $region77: #{tpu_custom_call.1} parent=0
    _
  %s6 = ssub.s32 1, %s4
  %s7 = scalar_select 0, %s6, %s4
  $region1: #{tpu_custom_call.1} parent=0
    #allocation3 [shape = 'u8[4096]{0}', space=vmem, size = 0x1000, scoped, tag = 'input window, operand 0, single buffered']
    #allocation4 [shape = 's32[2]{0}', space=sflag, size = 0x8, scoped, tag = 'scoped memory for tpu_custom_call.1']
    #allocation5 [shape = 's32[2]{0}', space=sflag, size = 0x8, scoped, tag = 'scoped memory for tpu_custom_call.1']
    #allocation6 [shape = 'u8[65536]{0}', space=vmem, size = 0x10000, scoped, tag = 'input window, operand 1, single buffered']
    #allocation7 [shape = 's32[1]{0}', space=sflag, size = 0x4, scoped, tag = 'scoped memory for tpu_custom_call.1']
    #allocation8 [shape = 'u8[8192]{0}', space=vmem, size = 0x2000, scoped, tag = 'output window, operand 0, single buffered']
    %8 = vsyncpa [#allocation4], 0
    %9 = vsyncpa [#allocation7], 0
    %10 = vsyncpa [#allocation5], 0
    loop: start=0, step=1, limit=4
    $region2: #{tpu_custom_call.1} parent=1 // loop_pre_header
      _
    $region3: #{tpu_custom_call.1} parent=1 // loop_header
      %s12 = sphi 0, %s16
      %p13 = scmp.ge.s32.totalorder %s12, 4
      %s19 = sphi 0, %s31
      %s20 = sphi 0, %s27
      %s21 = sphi 0, %s19
      %s22 = sphi 0, %s20
      %s23 = sphi 0, %s21
      %s24 = sphi 0, %s22
      %s34 = sphi 0, %s36
      %s37 = sphi 0, %s34
      %s38 = sphi 0, %s37
      %s54 = sphi 0, %s38
      %s58 = sphi 0, %s58
      %s60 = sphi 0, %s58
      %s61 = sphi 0, %s60
      %s75 = sphi 0, %s61
      %s79 = sphi 0, %s79
      %s81 = sphi 0, %s79
      %s82 = sphi 0, %s81
      %s96 = sphi 0, %s82
      %s102 = sphi 0, %s104
      %s105 = sphi 0, %s102
      %s106 = sphi 0, %s105
      %s122 = sphi 0, %s106
    $region4: #{tpu_custom_call.1} parent=1 // loop_header_branch
      %15 = sbr.rel (%p13) target = $region8
    $region5: #{tpu_custom_call.1} parent=1 // loop_body
      %s17 = ssub.s32 %s12, 1
      %s18 = ssub.s32 %s12, 2
      %s25 = sadd.s32 1, %s20
      %p26 = scmp.ge.s32.totalorder %s25, 2
      %s27 = scalar_select %p26, 0, %s25
      %s28 = sadd.s32 1, %s19
      %s29 = scalar_select %p26, %s28, %s19
      %p30 = scmp.ge.s32.totalorder %s29, 1
      %s31 = scalar_select %p30, 0, %s29
      %s32 = ssub.s32 %s19, %s31
      %p33 = scmp.eq.s32.totalorder %s32, 0
      %s35 = sadd.s32 %s34, 1
      %s36 = scalar_select %p33, %s34, %s35
      %p39 = pneg %p33
      %p40 = scmp.eq.s32.totalorder %s12, 1
      %p41 = por %p39, %p40
      %p42 = scmp.ne.s32.totalorder %s34, %s37
      %p43 = scmp.eq.s32.totalorder %s12, 0
      %p44 = por %p42, %p43
      %p45 = scmp.ne.s32.totalorder %s34, %s37
      %p46 = scmp.eq.s32.totalorder %s17, 1
      %p47 = por %p45, %p46
      %p48 = scmp.ne.s32.totalorder %s37, %s38
      %p49 = scmp.eq.s32.totalorder %s17, 0
      %p50 = por %p48, %p49
      %p51 = scmp.ne.s32.totalorder %s37, %s38
      %p52 = scmp.eq.s32.totalorder %s18, 1
      %p53 = por %p51, %p52
      %p55 = scmp.ne.s32.totalorder %s38, %s54
      %p56 = scmp.eq.s32.totalorder %s18, 0
      %p57 = por %p55, %p56
      %s59 = sadd.s32 %s58, 1
      %p62 = scmp.eq.s32.totalorder %s12, 1
      %p63 = scmp.ne.s32.totalorder %s58, %s60
      %p64 = scmp.eq.s32.totalorder %s12, 0
      %p65 = por %p63, %p64
      %p66 = scmp.ne.s32.totalorder %s58, %s60
      %p67 = scmp.eq.s32.totalorder %s17, 1
      %p68 = por %p66, %p67
      %p69 = scmp.ne.s32.totalorder %s60, %s61
      %p70 = scmp.eq.s32.totalorder %s17, 0
      %p71 = por %p69, %p70
      %p72 = scmp.ne.s32.totalorder %s60, %s61
      %p73 = scmp.eq.s32.totalorder %s18, 1
      %p74 = por %p72, %p73
      %p76 = scmp.ne.s32.totalorder %s61, %s75
      %p77 = scmp.eq.s32.totalorder %s18, 0
      %p78 = por %p76, %p77
      %s80 = sadd.s32 %s79, 1
      %p83 = scmp.eq.s32.totalorder %s12, 1
      %p84 = scmp.ne.s32.totalorder %s79, %s81
      %p85 = scmp.eq.s32.totalorder %s12, 0
      %p86 = por %p84, %p85
      %p87 = scmp.ne.s32.totalorder %s79, %s81
      %p88 = scmp.eq.s32.totalorder %s17, 1
      %p89 = por %p87, %p88
      %p90 = scmp.ne.s32.totalorder %s81, %s82
      %p91 = scmp.eq.s32.totalorder %s17, 0
      %p92 = por %p90, %p91
      %p93 = scmp.ne.s32.totalorder %s81, %s82
      %p94 = scmp.eq.s32.totalorder %s18, 1
      %p95 = por %p93, %p94
      %p97 = scmp.ne.s32.totalorder %s82, %s96
      %p98 = scmp.eq.s32.totalorder %s18, 0
      %p99 = por %p97, %p98
      %s100 = ssub.s32 %s19, %s31
      %p101 = scmp.eq.s32.totalorder %s100, 0
      %s103 = sadd.s32 %s102, 1
      %s104 = scalar_select %p101, %s102, %s103
      %p107 = pneg %p101
      %p108 = scmp.eq.s32.totalorder %s12, 1
      %p109 = por %p107, %p108
      %p110 = scmp.ne.s32.totalorder %s102, %s105
      %p111 = scmp.eq.s32.totalorder %s12, 0
      %p112 = por %p110, %p111
      %p113 = scmp.ne.s32.totalorder %s102, %s105
      %p114 = scmp.eq.s32.totalorder %s17, 1
      %p115 = por %p113, %p114
      %p116 = scmp.ne.s32.totalorder %s105, %s106
      %p117 = scmp.eq.s32.totalorder %s17, 0
      %p118 = por %p116, %p117
      %p119 = scmp.ne.s32.totalorder %s105, %s106
      %p120 = scmp.eq.s32.totalorder %s18, 1
      %p121 = por %p119, %p120
      %p123 = scmp.ne.s32.totalorder %s106, %s122
      %p124 = scmp.eq.s32.totalorder %s18, 0
      %p125 = por %p123, %p124
      %p126 = scmp.le.s32.totalorder 1, %s12
      %p127 = scmp.lt.s32.totalorder %s12, 3
      %p128 = pnand %p126, %p127
      %p129 = pneg %p128
      // Predicated region
      $region9: #{tpu_custom_call.1} parent=5 // pred_check
        _
      $region10: #{tpu_custom_call.1} parent=5 // pred_check_branch
        %131 = sbr.rel (%p128) target = $region12
      $region11: #{tpu_custom_call.1} parent=5 // pred_region
        %s132 = ssub.s32 %s12, 1
        // Predicated region
        $region13: #{tpu_custom_call.1} parent=11 // pred_check
          %p133 = pneg %p50
        $region14: #{tpu_custom_call.1} parent=11 // pred_check_branch
          %135 = sbr.rel (%p133) target = $region16
        $region15: #{tpu_custom_call.1} parent=11 // pred_region
          %s136 = smul.u32 2, %s21
          %s138 = ssub.s32 128, 128
          %139 = vsyncadd [#allocation4], %s138
          %s140 = smul.addr %s136, 64
          %s141 = scalar_lea.hbm %s0, %s140
          %s142 = sshll.u32 [#allocation3], 4
          %s143 = int_to_ptr.vmem [resolvable:$true] %s142
          %148 = dma.hbm_to_vmem [thread:$0]  %s141, 128, %s143, [#allocation4], 64, 64, 4
        $region16: #{tpu_custom_call.1} parent=11 // pred_fallthru
          _
        // Predicated region
        $region17: #{tpu_custom_call.1} parent=11 // pred_check
          %p149 = pneg %p71
        $region18: #{tpu_custom_call.1} parent=11 // pred_check_branch
          %151 = sbr.rel (%p149) target = $region20
        $region19: #{tpu_custom_call.1} parent=11 // pred_region
          %s153 = ssub.s32 2048, 2048
          %154 = vsyncadd [#allocation7], %s153
          %s155 = sshll.u32 [#allocation6], 4
          %s156 = int_to_ptr.vmem [resolvable:$true] %s155
          %161 = dma.hbm_to_vmem [thread:$0]  %s1, 2048, %s156, [#allocation7], 64, 64, 4
        $region20: #{tpu_custom_call.1} parent=11 // pred_fallthru
          _
        // Predicated region
        $region21: #{tpu_custom_call.1} parent=11 // pred_check
          %p162 = pneg %p92
        $region22: #{tpu_custom_call.1} parent=11 // pred_check_branch
          %164 = sbr.rel (%p162) target = $region24
        $region23: #{tpu_custom_call.1} parent=11 // pred_region
          _
        $region24: #{tpu_custom_call.1} parent=11 // pred_fallthru
          _
      $region12: #{tpu_custom_call.1} parent=5 // pred_fallthru
        _
      %p165 = scmp.lt.s32.totalorder %s12, 2
      // Predicated region
      $region25: #{tpu_custom_call.1} parent=5 // pred_check
        %p166 = pneg %p165
      $region26: #{tpu_custom_call.1} parent=5 // pred_check_branch
        %168 = sbr.rel (%p166) target = $region28
      $region27: #{tpu_custom_call.1} parent=5 // pred_region
        _
      $region28: #{tpu_custom_call.1} parent=5 // pred_fallthru
        _
      %p169 = scmp.le.s32.totalorder 1, %s12
      %p170 = scmp.lt.s32.totalorder %s12, 3
      %p171 = pnand %p169, %p170
      %p172 = pneg %p171
      // Predicated region
      $region29: #{tpu_custom_call.1} parent=5 // pred_check
        _
      $region30: #{tpu_custom_call.1} parent=5 // pred_check_branch
        %174 = sbr.rel (%p171) target = $region32
      $region31: #{tpu_custom_call.1} parent=5 // pred_region
        %s175 = ssub.s32 %s12, 1
        // Predicated region
        $region33: #{tpu_custom_call.1} parent=31 // pred_check
          %p176 = pneg %p50
        $region34: #{tpu_custom_call.1} parent=31 // pred_check_branch
          %178 = sbr.rel (%p176) target = $region36
        $region35: #{tpu_custom_call.1} parent=31 // pred_region
          %179 = dma.done [#allocation4], 128
        $region36: #{tpu_custom_call.1} parent=31 // pred_fallthru
          _
        // Predicated region
        $region37: #{tpu_custom_call.1} parent=31 // pred_check
          %p180 = pneg %p71
        $region38: #{tpu_custom_call.1} parent=31 // pred_check_branch
          %182 = sbr.rel (%p180) target = $region40
        $region39: #{tpu_custom_call.1} parent=31 // pred_region
          %183 = dma.done [#allocation7], 2048
        $region40: #{tpu_custom_call.1} parent=31 // pred_fallthru
          _
        %p184 = pneg %p50
        %p185 = pneg %p47
        %p186 = pneg %p71
        %p187 = pneg %p68
        %p188 = pneg %p92
        %p189 = pneg %p89
        %p190 = pneg %p118
        %p191 = pneg %p115
        %s192 = smul.u32 2, %s21
        %s193 = smul.u32 2, %s21
        %p195 = scmp.eq.s32.totalorder %s22, 0
        // Predicated region
        $region41: #{tpu_custom_call.1} parent=31 // pred_check
          %p196 = pneg %p195
        $region42: #{tpu_custom_call.1} parent=31 // pred_check_branch
          %198 = sbr.rel (%p196) target = $region44
        $region43: #{tpu_custom_call.1} parent=31 // pred_region
          %v199 = vld [vmem:[#allocation3] sm:$0xf]
          %v200 = vld [vmem:[#allocation3 + $0x4] sm:$0xf]
          %s201 = smul.u32 %s22, 16
          %s202 = smul.addr %s201, 4
          %s203 = scalar_lea.vmem [#allocation6], %s202
          %v204 = vld [vmem:[%s203] sm:$0xf]
          %v205 = vld [vmem:[%s203 + $0x4] sm:$0xf]
          %v206 = vld [vmem:[%s203 + $0x8] sm:$0xf]
          %v207 = vld [vmem:[%s203 + $0xc] sm:$0xf]
          %v208 = vld [vmem:[%s203 + $0x10] sm:$0xf]
          %v209 = vld [vmem:[%s203 + $0x14] sm:$0xf]
          %v210 = vld [vmem:[%s203 + $0x18] sm:$0xf]
          %v211 = vld [vmem:[%s203 + $0x1c] sm:$0xf]
          %v212 = vld [vmem:[%s203 + $0x20] sm:$0xf]
          %v213 = vld [vmem:[%s203 + $0x24] sm:$0xf]
          %v214 = vld [vmem:[%s203 + $0x28] sm:$0xf]
          %v215 = vld [vmem:[%s203 + $0x2c] sm:$0xf]
          %v216 = vld [vmem:[%s203 + $0x30] sm:$0xf]
          %v217 = vld [vmem:[%s203 + $0x34] sm:$0xf]
          %v218 = vld [vmem:[%s203 + $0x38] sm:$0xf]
          %v219 = vld [vmem:[%s203 + $0x3c] sm:$0xf]
          %s220 = scalar_lea.vmem %s2, %s22
          %v221 = vld [vmem:[%s220] sm:$0x1]
          %v223 = vlaneseq
          %v224 = vshrl.u32 %v223, 7
          %v225 = vsub.s32 0, %v224
          %v226 = vrot.slane %v221, %v225
          %v230 = vunpack.c.l.b16 %v199
          %v231 = vunpack.c.l.b16 %v200
          %v232 = vpack.c.b16 %v231, %v230
          %v250 = vunpack.c.l.b16 %v204
          %v251 = vunpack.c.l.b16 %v205
          %v252 = vunpack.c.l.b16 %v206
          %v253 = vunpack.c.l.b16 %v207
          %v254 = vunpack.c.l.b16 %v208
          %v255 = vunpack.c.l.b16 %v209
          %v256 = vunpack.c.l.b16 %v210
          %v257 = vunpack.c.l.b16 %v211
          %v258 = vunpack.c.l.b16 %v212
          %v259 = vunpack.c.l.b16 %v213
          %v260 = vunpack.c.l.b16 %v214
          %v261 = vunpack.c.l.b16 %v215
          %v262 = vunpack.c.l.b16 %v216
          %v263 = vunpack.c.l.b16 %v217
          %v264 = vunpack.c.l.b16 %v218
          %v265 = vunpack.c.l.b16 %v219
          %v266 = vpack.c.b16 %v251, %v250
          %v267 = vpack.c.b16 %v253, %v252
          %v268 = vpack.c.b16 %v255, %v254
          %v269 = vpack.c.b16 %v257, %v256
          %v270 = vpack.c.b16 %v259, %v258
          %v271 = vpack.c.b16 %v261, %v260
          %v272 = vpack.c.b16 %v263, %v262
          %v273 = vpack.c.b16 %v265, %v264
          %282 = vmatprep.subr.bf16.mxu0 0
          %283 = vmatpush1.bf16.msra.mxu0 %v266
          %284 = vmatprep.subr.bf16.mxu0 0
          %285 = vmatpush1.bf16.msra.mxu0 %v267
          %286 = vmatprep.subr.bf16.mxu0 0
          %287 = vmatpush1.bf16.msra.mxu0 %v268
          %288 = vmatprep.subr.bf16.mxu0 0
          %289 = vmatpush1.bf16.msra.mxu0 %v269
          %290 = vmatprep.subr.bf16.mxu0 0
          %291 = vmatpush1.bf16.msra.mxu0 %v270
          %292 = vmatprep.subr.bf16.mxu0 0
          %293 = vmatpush1.bf16.msra.mxu0 %v271
          %294 = vmatprep.subr.bf16.mxu0 0
          %295 = vmatpush1.bf16.msra.mxu0 %v272
          %296 = vmatprep.subr.bf16.mxu0 0
          %297 = vmatpush1.bf16.msra.mxu0 %v273
          %298 = vmatprep.subr.bf16.mxu0 0
          %299 = vmatpush1.bf16.msra.mxu0 0
          %300 = vmatprep.subr.bf16.mxu0 0
          %301 = vmatpush1.bf16.msra.mxu0 0
          %302 = vmatprep.subr.bf16.mxu0 0
          %303 = vmatpush1.bf16.msra.mxu0 0
          %304 = vmatprep.subr.bf16.mxu0 0
          %305 = vmatpush1.bf16.msra.mxu0 0
          %306 = vmatprep.subr.bf16.mxu0 0
          %307 = vmatpush1.bf16.msra.mxu0 0
          %308 = vmatprep.subr.bf16.mxu0 0
          %309 = vmatpush1.bf16.msra.mxu0 0
          %310 = vmatprep.subr.bf16.mxu0 0
          %311 = vmatpush1.bf16.msra.mxu0 0
          %312 = vmatprep.subr.bf16.mxu0 0
          %313 = vmatpush1.bf16.msra.mxu0 0
          %314 = vmatprep.mubr.bf16.mxu0 0
          %315 = vmatmul.mubr.bf16.gmra.mrb[0].mxu0 %v232
          %v316 = vpop.f32.mrb[0].mxu0
          %v317 = vadd.f32 %v226, %v316
          %v318 = vpop.f32.mrb[0].mxu0
          %v319 = vpop.f32.mrb[0].mxu0
          %v320 = vadd.f32 %v226, %v319
          %v321 = vpop.f32.mrb[0].mxu0
          %322 = vdwg.mxu0
          %v323 = vmax.f32 %v317, 0.0
          %v324 = vmax.f32 %v320, 0.0
          %p325 = scmp.lt.s32.totalorder %s22, 1
          // Predicated region
          $region45: #{tpu_custom_call.1} parent=43 // pred_check
            %p326 = pneg %p325
          $region46: #{tpu_custom_call.1} parent=43 // pred_check_branch
            %328 = sbr.rel (%p326) target = $region48
          $region47: #{tpu_custom_call.1} parent=43 // pred_region
            %v329 = vpack.c.bf16 %v324, %v323
            %330 = vst [vmem:[#allocation2] sm:$0xff] %v329
          $region48: #{tpu_custom_call.1} parent=43 // pred_fallthru
            _
          %p331 = scmp.eq.s32.totalorder %s22, 1
          // Predicated region
          $region49: #{tpu_custom_call.1} parent=43 // pred_check
            %p332 = pneg %p331
          $region50: #{tpu_custom_call.1} parent=43 // pred_check_branch
            %334 = sbr.rel (%p332) target = $region52
          $region51: #{tpu_custom_call.1} parent=43 // pred_region
            %335 = vst [vmem:[#allocation8] sm:$0xff] %v323
            %336 = vst [vmem:[#allocation8 + $0x8] sm:$0xff] %v324
          $region52: #{tpu_custom_call.1} parent=43 // pred_fallthru
            _
        $region44: #{tpu_custom_call.1} parent=31 // pred_fallthru
          _
        %p337 = scmp.ne.s32.totalorder %s22, 0
        // Predicated region
        $region53: #{tpu_custom_call.1} parent=31 // pred_check
          %p338 = pneg %p337
        $region54: #{tpu_custom_call.1} parent=31 // pred_check_branch
          %340 = sbr.rel (%p338) target = $region56
        $region55: #{tpu_custom_call.1} parent=31 // pred_region
          %v341 = vld [vmem:[#allocation2] sm:$0xff]
          %s342 = smul.u32 %s22, 16
          %s343 = smul.addr %s342, 4
          %s344 = scalar_lea.vmem [#allocation6], %s343
          %v345 = vld [vmem:[%s344] sm:$0xf]
          %v346 = vld [vmem:[%s344 + $0x4] sm:$0xf]
          %v347 = vld [vmem:[%s344 + $0x8] sm:$0xf]
          %v348 = vld [vmem:[%s344 + $0xc] sm:$0xf]
          %v349 = vld [vmem:[%s344 + $0x10] sm:$0xf]
          %v350 = vld [vmem:[%s344 + $0x14] sm:$0xf]
          %v351 = vld [vmem:[%s344 + $0x18] sm:$0xf]
          %v352 = vld [vmem:[%s344 + $0x1c] sm:$0xf]
          %v353 = vld [vmem:[%s344 + $0x20] sm:$0xf]
          %v354 = vld [vmem:[%s344 + $0x24] sm:$0xf]
          %v355 = vld [vmem:[%s344 + $0x28] sm:$0xf]
          %v356 = vld [vmem:[%s344 + $0x2c] sm:$0xf]
          %v357 = vld [vmem:[%s344 + $0x30] sm:$0xf]
          %v358 = vld [vmem:[%s344 + $0x34] sm:$0xf]
          %v359 = vld [vmem:[%s344 + $0x38] sm:$0xf]
          %v360 = vld [vmem:[%s344 + $0x3c] sm:$0xf]
          %s361 = scalar_lea.vmem %s2, %s22
          %v362 = vld [vmem:[%s361] sm:$0x1]
          %v364 = vlaneseq
          %v365 = vshrl.u32 %v364, 7
          %v366 = vsub.s32 0, %v365
          %v367 = vrot.slane %v362, %v366
          %v385 = vunpack.c.l.b16 %v345
          %v386 = vunpack.c.l.b16 %v346
          %v387 = vunpack.c.l.b16 %v347
          %v388 = vunpack.c.l.b16 %v348
          %v389 = vunpack.c.l.b16 %v349
          %v390 = vunpack.c.l.b16 %v350
          %v391 = vunpack.c.l.b16 %v351
          %v392 = vunpack.c.l.b16 %v352
          %v393 = vunpack.c.l.b16 %v353
          %v394 = vunpack.c.l.b16 %v354
          %v395 = vunpack.c.l.b16 %v355
          %v396 = vunpack.c.l.b16 %v356
          %v397 = vunpack.c.l.b16 %v357
          %v398 = vunpack.c.l.b16 %v358
          %v399 = vunpack.c.l.b16 %v359
          %v400 = vunpack.c.l.b16 %v360
          %v401 = vpack.c.b16 %v386, %v385
          %v402 = vpack.c.b16 %v388, %v387
          %v403 = vpack.c.b16 %v390, %v389
          %v404 = vpack.c.b16 %v392, %v391
          %v405 = vpack.c.b16 %v394, %v393
          %v406 = vpack.c.b16 %v396, %v395
          %v407 = vpack.c.b16 %v398, %v397
          %v408 = vpack.c.b16 %v400, %v399
          %417 = vmatprep.subr.bf16.mxu0 0
          %418 = vmatpush1.bf16.msra.mxu0 %v401
          %419 = vmatprep.subr.bf16.mxu0 0
          %420 = vmatpush1.bf16.msra.mxu0 %v402
          %421 = vmatprep.subr.bf16.mxu0 0
          %422 = vmatpush1.bf16.msra.mxu0 %v403
          %423 = vmatprep.subr.bf16.mxu0 0
          %424 = vmatpush1.bf16.msra.mxu0 %v404
          %425 = vmatprep.subr.bf16.mxu0 0
          %426 = vmatpush1.bf16.msra.mxu0 %v405
          %427 = vmatprep.subr.bf16.mxu0 0
          %428 = vmatpush1.bf16.msra.mxu0 %v406
          %429 = vmatprep.subr.bf16.mxu0 0
          %430 = vmatpush1.bf16.msra.mxu0 %v407
          %431 = vmatprep.subr.bf16.mxu0 0
          %432 = vmatpush1.bf16.msra.mxu0 %v408
          %433 = vmatprep.subr.bf16.mxu0 0
          %434 = vmatpush1.bf16.msra.mxu0 0
          %435 = vmatprep.subr.bf16.mxu0 0
          %436 = vmatpush1.bf16.msra.mxu0 0
          %437 = vmatprep.subr.bf16.mxu0 0
          %438 = vmatpush1.bf16.msra.mxu0 0
          %439 = vmatprep.subr.bf16.mxu0 0
          %440 = vmatpush1.bf16.msra.mxu0 0
          %441 = vmatprep.subr.bf16.mxu0 0
          %442 = vmatpush1.bf16.msra.mxu0 0
          %443 = vmatprep.subr.bf16.mxu0 0
          %444 = vmatpush1.bf16.msra.mxu0 0
          %445 = vmatprep.subr.bf16.mxu0 0
          %446 = vmatpush1.bf16.msra.mxu0 0
          %447 = vmatprep.subr.bf16.mxu0 0
          %448 = vmatpush1.bf16.msra.mxu0 0
          %449 = vmatprep.mubr.bf16.mxu0 0
          %450 = vmatmul.mubr.bf16.gmra.mrb[0].mxu0 %v341
          %v451 = vpop.f32.mrb[0].mxu0
          %v452 = vadd.f32 %v367, %v451
          %v453 = vpop.f32.mrb[0].mxu0
          %v454 = vpop.f32.mrb[0].mxu0
          %v455 = vadd.f32 %v367, %v454
          %v456 = vpop.f32.mrb[0].mxu0
          %457 = vdwg.mxu0
          %v458 = vmax.f32 %v452, 0.0
          %v459 = vmax.f32 %v455, 0.0
          %p460 = scmp.lt.s32.totalorder %s22, 1
          // Predicated region
          $region57: #{tpu_custom_call.1} parent=55 // pred_check
            %p461 = pneg %p460
          $region58: #{tpu_custom_call.1} parent=55 // pred_check_branch
            %463 = sbr.rel (%p461) target = $region60
          $region59: #{tpu_custom_call.1} parent=55 // pred_region
            %v464 = vpack.c.bf16 %v459, %v458
            %465 = vst [vmem:[#allocation2] sm:$0xff] %v464
          $region60: #{tpu_custom_call.1} parent=55 // pred_fallthru
            _
          %p466 = scmp.eq.s32.totalorder %s22, 1
          // Predicated region
          $region61: #{tpu_custom_call.1} parent=55 // pred_check
            %p467 = pneg %p466
          $region62: #{tpu_custom_call.1} parent=55 // pred_check_branch
            %469 = sbr.rel (%p467) target = $region64
          $region63: #{tpu_custom_call.1} parent=55 // pred_region
            %470 = vst [vmem:[#allocation8] sm:$0xff] %v458
            %471 = vst [vmem:[#allocation8 + $0x8] sm:$0xff] %v459
          $region64: #{tpu_custom_call.1} parent=55 // pred_fallthru
            _
        $region56: #{tpu_custom_call.1} parent=31 // pred_fallthru
          _
        // Predicated region
        $region65: #{tpu_custom_call.1} parent=31 // pred_check
          %p472 = pneg %p115
        $region66: #{tpu_custom_call.1} parent=31 // pred_check_branch
          %474 = sbr.rel (%p472) target = $region68
        $region67: #{tpu_custom_call.1} parent=31 // pred_region
          %s475 = smul.u32 2, %s21
          %s477 = ssub.s32 256, 256
          %478 = vsyncadd [#allocation5], %s477
          %s479 = smul.addr %s475, 128
          %s480 = scalar_lea.hbm %s3, %s479
          %s481 = sshll.u32 [#allocation8], 4
          %s482 = int_to_ptr.vmem [resolvable:$true] %s481
          %487 = dma.vmem_to_hbm [thread:$0]  %s482, 256, %s480, [#allocation5], 128, 128, 8
        $region68: #{tpu_custom_call.1} parent=31 // pred_fallthru
          _
        // Predicated region
        $region69: #{tpu_custom_call.1} parent=31 // pred_check
          %p488 = pneg %p115
        $region70: #{tpu_custom_call.1} parent=31 // pred_check_branch
          %490 = sbr.rel (%p488) target = $region72
        $region71: #{tpu_custom_call.1} parent=31 // pred_region
          %491 = dma.done [#allocation5], 256
        $region72: #{tpu_custom_call.1} parent=31 // pred_fallthru
          _
      $region32: #{tpu_custom_call.1} parent=5 // pred_fallthru
        _
      %p492 = scmp.le.s32.totalorder 2, %s12
      // Predicated region
      $region73: #{tpu_custom_call.1} parent=5 // pred_check
        %p493 = pneg %p492
      $region74: #{tpu_custom_call.1} parent=5 // pred_check_branch
        %495 = sbr.rel (%p493) target = $region76
      $region75: #{tpu_custom_call.1} parent=5 // pred_region
        %s496 = ssub.s32 %s12, 2
      $region76: #{tpu_custom_call.1} parent=5 // pred_fallthru
        _
    $region6: #{tpu_custom_call.1} parent=1 // loop_footer
      %s16 = sadd.s32 1, %s12
    $region7: #{tpu_custom_call.1} parent=1 // loop_footer_branch
      %11 = sbr.rel target = $region3
    $region8: #{tpu_custom_call.1} parent=1 // loop_exit
      _
    %497 = vsyncpa [#allocation4], 1
    %s498 = scalar_lea.sflag [#allocation4], 1
    %499 = vsyncpa %s498, 1
    %500 = vsyncpa [#allocation7], 1
    %501 = vsyncpa [#allocation5], 1
    %s502 = scalar_lea.sflag [#allocation5], 1
    %503 = vsyncpa %s502, 1

</llo_original>
